<compile_context>
chip_gen: v6e
topology: v6e:2x2x1
jax: 0.10.0
libtpu: 0.0.40
codegen_flags: <defaults>
</compile_context>

<pallas_src>
import math

import jax
import jax.numpy as jnp
from jax import lax
from jax.experimental import pallas as pl
from jax.experimental.pallas import tpu as pltpu

_MIB = 1024 * 1024

# (tm, tn, tk) defaults per generation, chosen so a steady-state k-step is compute-bound
# on that chip's HBM/MXU roofline (v6e needs ~680 flop/byte -> 1024 tiles; v7x ~310 -> 512).
_GEN_TILE_DEFAULTS = {
    "v5e": (512, 512, 1024),
    "v6e": (1024, 1024, 512),
    "v7x": (512, 512, 1024),
}


def _round_up(x, m):
    return ((x + m - 1) // m) * m


def _min_sublane(dtype):
    # (8,128) tile for 4-byte types, (16,128) for 2-byte, (32,128) for 1-byte.
    return max(8, 32 // jnp.dtype(dtype).itemsize)


def _tpu_hw():
    """Best-effort TPU generation + per-core VMEM capacity (host-time query, cheap)."""
    kind = ""
    vmem_cap = None
    try:
        kind = (jax.devices()[0].device_kind or "").lower()
    except Exception:
        pass
    try:
        info = pltpu.get_tpu_info()
        vmem_cap = int(getattr(info, "vmem_capacity_bytes", 0)) or None
    except Exception:
        vmem_cap = None

    if "v5" in kind:
        gen = "v5e"
    elif "v6" in kind:
        gen = "v6e"
    elif "v7" in kind:
        gen = "v7x"
    elif vmem_cap is not None and vmem_cap <= 80 * _MIB:
        gen = "v7x"
    else:
        gen = "v6e"

    if vmem_cap is None:
        vmem_cap = 64 * _MIB if gen == "v7x" else 128 * _MIB
    return gen, vmem_cap


# -------------------------------- kernels --------------------------------

_INV_SQRT2 = 0.7071067811865476


def _gelu_exact(gate):
    # exact (erf-based) GELU, matching torch.nn.functional.gelu default
    return 0.5 * gate * (1.0 + lax.erf(gate * jnp.float32(_INV_SQRT2)))


def _geglu_kernel_single_k(x_ref, wv_ref, wg_ref, bv_ref, bg_ref, o_ref):
    """Whole reduction in one step: no accumulator scratch, 2-D (i, j) grid."""
    x = x_ref[...]
    val = jnp.dot(x, wv_ref[...], preferred_element_type=jnp.float32) + bv_ref[...]
    gate = jnp.dot(x, wg_ref[...], preferred_element_type=jnp.float32) + bg_ref[...]
    o_ref[...] = (val * _gelu_exact(gate)).astype(o_ref.dtype)


def _geglu_kernel_multi_k(x_ref, wv_ref, wg_ref, bv_ref, bg_ref, o_ref, acc_v, acc_g):
    """3-D (i, j, k) grid with f32 VMEM accumulators; bias folded into the k==0 init."""
    k = pl.program_id(2)

    @pl.when(k == 0)
    def _():
        acc_v[...] = jnp.broadcast_to(bv_ref[...], acc_v.shape).astype(jnp.float32)
        acc_g[...] = jnp.broadcast_to(bg_ref[...], acc_g.shape).astype(jnp.float32)

    x = x_ref[...]
    acc_v[...] += jnp.dot(x, wv_ref[...], preferred_element_type=jnp.float32)
    acc_g[...] += jnp.dot(x, wg_ref[...], preferred_element_type=jnp.float32)

    @pl.when(k == pl.num_programs(2) - 1)
    def _():
        o_ref[...] = (acc_v[...] * _gelu_exact(acc_g[...])).astype(o_ref.dtype)


# -------------------------------- wrapper --------------------------------


def make_geglu(w, b, *, compute_dtype=jnp.bfloat16, tm=None, tn=None, tk=None):
    """Build a GEGLU forward closure.

    w : (dim_in, 2*dim_out)   -- transpose of the PyTorch nn.Linear weight
    b : (2*dim_out,)
    compute_dtype : matmul-operand dtype (bf16 default; accumulation is always f32).
                    Pass jnp.float32 for a bit-exact erf/f32 path.

    The weight split / pad / cast happens ONCE here, outside the per-call hot path.
    """
    dim_in, two_dim_out = w.shape
    dim_out = two_dim_out // 2
    mm_dtype = jnp.dtype(compute_dtype)
    mm_item = mm_dtype.itemsize
    sub = _min_sublane(mm_dtype)

    gen, vmem_cap = _tpu_hw()
    d_tm, d_tn, d_tk = _GEN_TILE_DEFAULTS[gen]
    tm = d_tm if tm is None else tm
    tn = d_tn if tn is None else tn
    tk = d_tk if tk is None else tk

    # Shrink N/K tiles to the (128-aligned) problem; lane-dense output stays a multiple of 128.
    tn = min(tn, _round_up(dim_out, 128))
    Np = _round_up(dim_out, tn)

    K128 = _round_up(dim_in, 128)
    single_k_cap = 2048 if mm_item <= 2 else 1024
    single_k = K128 <= max(tk, single_k_cap)
    if single_k:
        tk = K128
        Kp = K128
    else:
        tk = min(tk, K128)
        Kp = _round_up(dim_in, tk)

    # ---- one-time weight prep: split into val/gate halves, pad, cast ----
    w_val = w[:, :dim_out]
    w_gate = w[:, dim_out:]
    if (Kp, Np) != (dim_in, dim_out):
        w_val = jnp.pad(w_val, ((0, Kp - dim_in), (0, Np - dim_out)))
        w_gate = jnp.pad(w_gate, ((0, Kp - dim_in), (0, Np - dim_out)))
    w_val = w_val.astype(mm_dtype)
    w_gate = w_gate.astype(mm_dtype)
    b_val = jnp.pad(b[:dim_out], (0, Np - dim_out)).astype(jnp.float32).reshape(1, Np)
    b_gate = jnp.pad(b[dim_out:], (0, Np - dim_out)).astype(jnp.float32).reshape(1, Np)

    def geglu(x):
        assert x.shape[-1] == dim_in, "last dim of x must equal dim_in"
        lead = x.shape[:-1]
        M = math.prod(lead) if lead else 1
        out_dtype = x.dtype
        out_item = jnp.dtype(out_dtype).itemsize

        # Per-call row tile: never larger than the (sublane-aligned) row count.
        tm_c = min(tm, _round_up(M, sub))
        tn_c = tn
        # v7x has two TensorCores: make sure there are >= 2 parallel (i, j) tiles.
        if gen == "v7x" and pl.cdiv(M, tm_c) * (Np // tn_c) < 2:
            if tm_c // 2 >= sub and tm_c % (2 * sub) == 0 and pl.cdiv(M, tm_c // 2) >= 2:
                tm_c //= 2
            elif tn_c // 2 >= 128 and tn_c % 256 == 0:
                tn_c //= 2

        Mp = _round_up(M, tm_c)

        # Per-call activation prep only (pad + cast) — weights were prepared once above.
        x2 = x.reshape(M, dim_in)
        if (Mp, Kp) != (M, dim_in):
            x2 = jnp.pad(x2, ((0, Mp - M), (0, Kp - dim_in)))
        x2 = x2.astype(mm_dtype)

        # Generation-aware VMEM budget: double-buffered tiles (+ accumulators if multi-k),
        # capped at physical VMEM minus headroom for Mosaic internal scratch.
        buffered = (
            tm_c * tk * mm_item            # x tile
            + 2 * tk * tn_c * mm_item      # w_val + w_gate tiles
            + 2 * tn_c * 4                 # bias tiles (f32)
            + tm_c * tn_c * out_item       # output tile
        )
        need = 2 * buffered + (0 if single_k else 2 * tm_c * tn_c * 4)
        vmem_limit = int(min(max(2 * need, 32 * _MIB), max(vmem_cap - 16 * _MIB, 32 * _MIB)))

        cost = pl.CostEstimate(
            flops=2 * Mp * Kp * 2 * Np + 10 * Mp * Np,
            transcendentals=Mp * Np,
            bytes_accessed=(Mp * Kp * mm_item + 2 * Kp * Np * mm_item
                            + 2 * Np * 4 + Mp * Np * out_item),
        )

        if single_k:
            grid = (Mp // tm_c, Np // tn_c)
            out = pl.pallas_call(
                _geglu_kernel_single_k,
                out_shape=jax.ShapeDtypeStruct((Mp, Np), out_dtype),
                grid_spec=pltpu.PrefetchScalarGridSpec(
                    num_scalar_prefetch=0,
                    grid=grid,
                    in_specs=[
                        pl.BlockSpec((tm_c, Kp), lambda i, j: (i, 0)),   # x row-tile (full K)
                        pl.BlockSpec((Kp, tn_c), lambda i, j: (0, j)),   # w_val column-tile
                        pl.BlockSpec((Kp, tn_c), lambda i, j: (0, j)),   # w_gate column-tile
                        pl.BlockSpec((1, tn_c), lambda i, j: (0, j)),    # b_val
                        pl.BlockSpec((1, tn_c), lambda i, j: (0, j)),    # b_gate
                    ],
                    out_specs=pl.BlockSpec((tm_c, tn_c), lambda i, j: (i, j)),
                ),
                compiler_params=pltpu.CompilerParams(
                    dimension_semantics=("parallel", "parallel"),
                    vmem_limit_bytes=vmem_limit,
                ),
                cost_estimate=cost,
            )(x2, w_val, w_gate, b_val, b_gate)
        else:
            grid = (Mp // tm_c, Np // tn_c, Kp // tk)
            out = pl.pallas_call(
                _geglu_kernel_multi_k,
                out_shape=jax.ShapeDtypeStruct((Mp, Np), out_dtype),
                grid_spec=pltpu.PrefetchScalarGridSpec(
                    num_scalar_prefetch=0,
                    grid=grid,
                    in_specs=[
                        pl.BlockSpec((tm_c, tk), lambda i, j, k: (i, k)),   # x tile
                        pl.BlockSpec((tk, tn_c), lambda i, j, k: (k, j)),   # w_val tile
                        pl.BlockSpec((tk, tn_c), lambda i, j, k: (k, j)),   # w_gate tile
                        pl.BlockSpec((1, tn_c), lambda i, j, k: (0, j)),    # b_val
                        pl.BlockSpec((1, tn_c), lambda i, j, k: (0, j)),    # b_gate
                    ],
                    out_specs=pl.BlockSpec((tm_c, tn_c), lambda i, j, k: (i, j)),
                    scratch_shapes=[
                        pltpu.VMEM((tm_c, tn_c), jnp.float32),  # val accumulator
                        pltpu.VMEM((tm_c, tn_c), jnp.float32),  # gate accumulator
                    ],
                ),
                compiler_params=pltpu.CompilerParams(
                    dimension_semantics=("parallel", "parallel", "arbitrary"),
                    vmem_limit_bytes=vmem_limit,
                ),
                cost_estimate=cost,
            )(x2, w_val, w_gate, b_val, b_gate)

        out = out[:M, :dim_out]
        return out.reshape(*lead, dim_out)

    return geglu


# -------------------------------- demo / check --------------------------------

if __name__ == "__main__":
    # Small shapes consistent with the module: batch=2, seq=8, dim_in=32, dim_out=32
    batch, seq, dim_in, dim_out = 2, 8, 32, 32

    key = jax.random.PRNGKey(0)
    kx, kw, kb = jax.random.split(key, 3)

    x = jax.random.normal(kx, (batch, seq, dim_in), dtype=jnp.float32)
    # deterministic "Linear" params (nn.Linear(dim_in, 2*dim_out)):
    # PyTorch weight shape (2*dim_out, dim_in); we store its transpose (dim_in, 2*dim_out)
    bound = 1.0 / math.sqrt(dim_in)
    w = jax.random.uniform(kw, (dim_in, 2 * dim_out), jnp.float32, -bound, bound)
    b = jax.random.uniform(kb, (2 * dim_out,), jnp.float32, -bound, bound)

    def ref_geglu(xr, wr, br):
        h = jnp.dot(xr, wr, precision=lax.Precision.HIGHEST) + br
        val, gate = jnp.split(h, 2, axis=-1)
        return val * (0.5 * gate * (1.0 + lax.erf(gate * jnp.float32(_INV_SQRT2))))

    # Default path: bf16 matmul operands, f32 accumulation.
    geglu_bf16 = make_geglu(w, b)                       # compute_dtype defaults to bf16
    out_bf16 = jax.block_until_ready(geglu_bf16(x))
    assert out_bf16.shape == (batch, seq, dim_out)
    ref_bf16 = ref_geglu(x.astype(jnp.bfloat16).astype(jnp.float32),
                         w.astype(jnp.bfloat16).astype(jnp.float32), b)
    assert jnp.allclose(out_bf16, ref_bf16, atol=1e-2, rtol=1e-2)

    # Bit-match path: f32 matmul operands (matches torch's exact erf GELU reference).
    geglu_f32 = make_geglu(w, b, compute_dtype=jnp.float32)
    out_f32 = jax.block_until_ready(geglu_f32(x))
    ref_f32 = ref_geglu(x, w, b)
    assert out_f32.shape == (batch, seq, dim_out)
    assert jnp.allclose(out_f32, ref_f32, atol=1e-4, rtol=1e-4)

    print("KERNEL_OK")
</pallas_src>

<mosaic_0001>
module attributes {stable_mosaic.version = 11 : i64} {
  func.func @_geglu_kernel_single_k(%arg0: i32, %arg1: i32, %arg2: memref<16x128xbf16, #tpu.memory_space<vmem>>, %arg3: memref<128x128xbf16, #tpu.memory_space<vmem>>, %arg4: memref<128x128xbf16, #tpu.memory_space<vmem>>, %arg5: memref<1x128xf32, #tpu.memory_space<vmem>>, %arg6: memref<1x128xf32, #tpu.memory_space<vmem>>, %arg7: memref<16x128xf32, #tpu.memory_space<vmem>>) attributes {dimension_semantics = [#tpu.dimension_semantics<parallel>, #tpu.dimension_semantics<parallel>], iteration_bounds = array<i64: 1, 1>, scalar_prefetch = 0 : i64, scratch_operands = 0 : i64, tpu.core_type = #tpu.core_type<tc>, window_params = [{transform_indices = @transform_0, window_bounds = array<i64: 16, 128>}, {transform_indices = @transform_1, window_bounds = array<i64: 128, 128>}, {transform_indices = @transform_2, window_bounds = array<i64: 128, 128>}, {transform_indices = @transform_3, window_bounds = array<i64: 1, 128>}, {transform_indices = @transform_4, window_bounds = array<i64: 1, 128>}, {transform_indices = @transform_5, window_bounds = array<i64: 16, 128>}]} {
    %c0 = arith.constant 0 : index
    %c0_0 = arith.constant 0 : index
    %0 = vector.load %arg2[%c0, %c0_0] : memref<16x128xbf16, #tpu.memory_space<vmem>>, vector<16x128xbf16>
    %c0_1 = arith.constant 0 : index
    %c0_2 = arith.constant 0 : index
    %1 = vector.load %arg3[%c0_1, %c0_2] : memref<128x128xbf16, #tpu.memory_space<vmem>>, vector<128x128xbf16>
    %cst = arith.constant dense<0.000000e+00> : vector<16x128xf32>
    %2 = tpu.matmul %0, %1, %cst {dimension_numbers = #tpu.dot_dimension_numbers<[1], [0], [0], [1], [0, 0, 1, 1], [], []>} : vector<16x128xbf16>, vector<128x128xbf16>, vector<16x128xf32> -> vector<16x128xf32>
    %c0_3 = arith.constant 0 : index
    %c0_4 = arith.constant 0 : index
    %3 = vector.load %arg5[%c0_3, %c0_4] : memref<1x128xf32, #tpu.memory_space<vmem>>, vector<1x128xf32>
    %4 = vector.broadcast %3 : vector<1x128xf32> to vector<16x128xf32>
    %5 = arith.addf %2, %4 : vector<16x128xf32>
    %c0_5 = arith.constant 0 : index
    %c0_6 = arith.constant 0 : index
    %6 = vector.load %arg4[%c0_5, %c0_6] : memref<128x128xbf16, #tpu.memory_space<vmem>>, vector<128x128xbf16>
    %cst_7 = arith.constant dense<0.000000e+00> : vector<16x128xf32>
    %7 = tpu.matmul %0, %6, %cst_7 {dimension_numbers = #tpu.dot_dimension_numbers<[1], [0], [0], [1], [0, 0, 1, 1], [], []>} : vector<16x128xbf16>, vector<128x128xbf16>, vector<16x128xf32> -> vector<16x128xf32>
    %c0_8 = arith.constant 0 : index
    %c0_9 = arith.constant 0 : index
    %8 = vector.load %arg6[%c0_8, %c0_9] : memref<1x128xf32, #tpu.memory_space<vmem>>, vector<1x128xf32>
    %9 = vector.broadcast %8 : vector<1x128xf32> to vector<16x128xf32>
    %10 = arith.addf %7, %9 : vector<16x128xf32>
    %cst_10 = arith.constant 5.000000e-01 : f32
    %11 = vector.broadcast %cst_10 : f32 to vector<16x128xf32>
    %12 = arith.mulf %11, %10 : vector<16x128xf32>
    %cst_11 = arith.constant 0.707106769 : f32
    %13 = vector.broadcast %cst_11 : f32 to vector<16x128xf32>
    %14 = arith.mulf %10, %13 : vector<16x128xf32>
    %15 = math.erf %14 : vector<16x128xf32>
    %cst_12 = arith.constant 1.000000e+00 : f32
    %16 = vector.broadcast %cst_12 : f32 to vector<16x128xf32>
    %17 = arith.addf %16, %15 : vector<16x128xf32>
    %18 = arith.mulf %12, %17 : vector<16x128xf32>
    %19 = arith.mulf %5, %18 : vector<16x128xf32>
    %c0_13 = arith.constant 0 : index
    %c0_14 = arith.constant 0 : index
    %20 = vector.load %arg7[%c0_13, %c0_14] : memref<16x128xf32, #tpu.memory_space<vmem>>, vector<16x128xf32>
    tpu.vector_store %arg7[%c0_13, %c0_14], %19 {strides = array<i32>} : memref<16x128xf32, #tpu.memory_space<vmem>>, vector<16x128xf32>,
    return
  }
  func.func @transform_0(%arg0: i32, %arg1: i32) -> (i32, i32) {
    %c0_i32 = arith.constant 0 : i32
    %c0_i32_0 = arith.constant 0 : i32
    return %arg0, %c0_i32 : i32, i32
  }
  func.func @transform_1(%arg0: i32, %arg1: i32) -> (i32, i32) {
    %c0_i32 = arith.constant 0 : i32
    %c0_i32_0 = arith.constant 0 : i32
    return %c0_i32, %arg1 : i32, i32
  }
  func.func @transform_2(%arg0: i32, %arg1: i32) -> (i32, i32) {
    %c0_i32 = arith.constant 0 : i32
    %c0_i32_0 = arith.constant 0 : i32
    return %c0_i32, %arg1 : i32, i32
  }
  func.func @transform_3(%arg0: i32, %arg1: i32) -> (i32, i32) {
    %c0_i32 = arith.constant 0 : i32
    %c0_i32_0 = arith.constant 0 : i32
    return %c0_i32, %arg1 : i32, i32
  }
  func.func @transform_4(%arg0: i32, %arg1: i32) -> (i32, i32) {
    %c0_i32 = arith.constant 0 : i32
    %c0_i32_0 = arith.constant 0 : i32
    return %c0_i32, %arg1 : i32, i32
  }
  func.func @transform_5(%arg0: i32, %arg1: i32) -> (i32, i32) {
    %c0_i32 = arith.constant 0 : i32
    return %arg0, %arg1 : i32, i32
  }
}

</mosaic_0001>

<llo_original>
// kernel: tpu_custom_call.1
$region0: #{tpu_custom_call.1}
  #allocation0 [shape = 'u32[]', space=smem, size = 0x4, offset = 0x4, fixed_abs, tag = 'smem constant byte address 0x4 - core index']
  #allocation1 [shape = 'u32[144,128]{1,0:T(1,128)}', space=vmem, size = 0x12000, scoped, tag = 'internal scratch']
  %s0 = inlined_call_operand.hbm [shape: bf16[16,128], index: 0, kind: input, shape index: {}]
  %s1 = inlined_call_operand.hbm [shape: bf16[128,128], index: 1, kind: input, shape index: {}]
  %s2 = inlined_call_operand.hbm [shape: bf16[128,128], index: 2, kind: input, shape index: {}]
  %s3 = inlined_call_operand.vmem [shape: f32[1,128], index: 3, kind: input, shape index: {}]
  %s4 = inlined_call_operand.vmem [shape: f32[1,128], index: 4, kind: input, shape index: {}]
  %s5 = inlined_call_operand.hbm [shape: f32[16,128], index: 5, kind: output, shape index: {}]
  %s6 = sld [smem:[#allocation0]]
  $region42: #{tpu_custom_call.1} parent=0
    _
  %s8 = ssub.s32 1, %s6
  %s9 = scalar_select 0, %s8, %s6
  $region1: #{tpu_custom_call.1} parent=0
    #allocation2 [shape = 'u8[4096]{0}', space=vmem, size = 0x1000, scoped, tag = 'input window, operand 0, single buffered']
    #allocation3 [shape = 's32[1]{0}', space=sflag, size = 0x4, scoped, tag = 'scoped memory for tpu_custom_call.1']
    #allocation4 [shape = 's32[1]{0}', space=sflag, size = 0x4, scoped, tag = 'scoped memory for tpu_custom_call.1']
    #allocation5 [shape = 'u8[32768]{0}', space=vmem, size = 0x8000, scoped, tag = 'input window, operand 1, single buffered']
    #allocation6 [shape = 's32[1]{0}', space=sflag, size = 0x4, scoped, tag = 'scoped memory for tpu_custom_call.1']
    #allocation7 [shape = 'u8[32768]{0}', space=vmem, size = 0x8000, scoped, tag = 'input window, operand 2, single buffered']
    #allocation8 [shape = 'u8[8192]{0}', space=vmem, size = 0x2000, scoped, tag = 'output window, operand 0, single buffered']
    %10 = vsyncpa [#allocation3], 0
    %11 = vsyncpa [#allocation6], 0
    %12 = vsyncpa [#allocation4], 0
    // Predicated region
    $region2: #{tpu_custom_call.1} parent=1 // pred_check
      _
    $region3: #{tpu_custom_call.1} parent=1 // pred_check_branch
      %14 = sbr.rel (0) target = $region5
    $region4: #{tpu_custom_call.1} parent=1 // pred_region
      %s16 = ssub.s32 128, 128
      %17 = vsyncadd [#allocation3], %s16
      %s18 = sshll.u32 [#allocation2], 4
      %s19 = int_to_ptr.vmem [resolvable:$true] %s18
      %24 = dma.hbm_to_vmem [thread:$0]  %s0, 128, %s19, [#allocation3], 64, 64, 4
    $region5: #{tpu_custom_call.1} parent=1 // pred_fallthru
      _
    // Predicated region
    $region6: #{tpu_custom_call.1} parent=1 // pred_check
      _
    $region7: #{tpu_custom_call.1} parent=1 // pred_check_branch
      %26 = sbr.rel (0) target = $region9
    $region8: #{tpu_custom_call.1} parent=1 // pred_region
      %s28 = ssub.s32 1024, 1024
      %29 = vsyncadd [#allocation6], %s28
      %s30 = sshll.u32 [#allocation5], 4
      %s31 = int_to_ptr.vmem [resolvable:$true] %s30
      %36 = dma.hbm_to_vmem [thread:$0]  %s1, 1024, %s31, [#allocation6], 64, 64, 4
    $region9: #{tpu_custom_call.1} parent=1 // pred_fallthru
      _
    // Predicated region
    $region10: #{tpu_custom_call.1} parent=1 // pred_check
      _
    $region11: #{tpu_custom_call.1} parent=1 // pred_check_branch
      %38 = sbr.rel (0) target = $region13
    $region12: #{tpu_custom_call.1} parent=1 // pred_region
      %s40 = ssub.s32 1024, 1024
      %41 = vsyncadd [#allocation6], %s40
      %s42 = sshll.u32 [#allocation7], 4
      %s43 = int_to_ptr.vmem [resolvable:$true] %s42
      %48 = dma.hbm_to_vmem [thread:$0]  %s2, 1024, %s43, [#allocation6], 64, 64, 4
    $region13: #{tpu_custom_call.1} parent=1 // pred_fallthru
      _
    // Predicated region
    $region14: #{tpu_custom_call.1} parent=1 // pred_check
      _
    $region15: #{tpu_custom_call.1} parent=1 // pred_check_branch
      %50 = sbr.rel (0) target = $region17
    $region16: #{tpu_custom_call.1} parent=1 // pred_region
      _
    $region17: #{tpu_custom_call.1} parent=1 // pred_fallthru
      _
    // Predicated region
    $region18: #{tpu_custom_call.1} parent=1 // pred_check
      _
    $region19: #{tpu_custom_call.1} parent=1 // pred_check_branch
      %52 = sbr.rel (0) target = $region21
    $region20: #{tpu_custom_call.1} parent=1 // pred_region
      _
    $region21: #{tpu_custom_call.1} parent=1 // pred_fallthru
      _
    // Predicated region
    $region22: #{tpu_custom_call.1} parent=1 // pred_check
      _
    $region23: #{tpu_custom_call.1} parent=1 // pred_check_branch
      %54 = sbr.rel (0) target = $region25
    $region24: #{tpu_custom_call.1} parent=1 // pred_region
      %55 = dma.done [#allocation3], 128
    $region25: #{tpu_custom_call.1} parent=1 // pred_fallthru
      _
    // Predicated region
    $region26: #{tpu_custom_call.1} parent=1 // pred_check
      _
    $region27: #{tpu_custom_call.1} parent=1 // pred_check_branch
      %57 = sbr.rel (0) target = $region29
    $region28: #{tpu_custom_call.1} parent=1 // pred_region
      %58 = dma.done [#allocation6], 1024
    $region29: #{tpu_custom_call.1} parent=1 // pred_fallthru
      _
    // Predicated region
    $region30: #{tpu_custom_call.1} parent=1 // pred_check
      _
    $region31: #{tpu_custom_call.1} parent=1 // pred_check_branch
      %60 = sbr.rel (0) target = $region33
    $region32: #{tpu_custom_call.1} parent=1 // pred_region
      %61 = dma.done [#allocation6], 1024
    $region33: #{tpu_custom_call.1} parent=1 // pred_fallthru
      _
    %v63 = vld [vmem:[#allocation2] sm:$0xf]
    %v64 = vld [vmem:[#allocation2 + $0x4] sm:$0xf]
    %v65 = vld [vmem:[#allocation5] sm:$0xf]
    %v66 = vld [vmem:[#allocation5 + $0x4] sm:$0xf]
    %v67 = vld [vmem:[#allocation5 + $0x8] sm:$0xf]
    %v68 = vld [vmem:[#allocation5 + $0xc] sm:$0xf]
    %v69 = vld [vmem:[#allocation5 + $0x10] sm:$0xf]
    %v70 = vld [vmem:[#allocation5 + $0x14] sm:$0xf]
    %v71 = vld [vmem:[#allocation5 + $0x18] sm:$0xf]
    %v72 = vld [vmem:[#allocation5 + $0x1c] sm:$0xf]
    %v73 = vld [vmem:[#allocation5 + $0x20] sm:$0xf]
    %v74 = vld [vmem:[#allocation5 + $0x24] sm:$0xf]
    %v75 = vld [vmem:[#allocation5 + $0x28] sm:$0xf]
    %v76 = vld [vmem:[#allocation5 + $0x2c] sm:$0xf]
    %v77 = vld [vmem:[#allocation5 + $0x30] sm:$0xf]
    %v78 = vld [vmem:[#allocation5 + $0x34] sm:$0xf]
    %v79 = vld [vmem:[#allocation5 + $0x38] sm:$0xf]
    %v80 = vld [vmem:[#allocation5 + $0x3c] sm:$0xf]
    %v81 = vld [vmem:[%s3] sm:$0x1]
    %v83 = vlaneseq
    %v84 = vshrl.u32 %v83, 7
    %v85 = vsub.s32 0, %v84
    %v86 = vrot.slane %v81, %v85
    %v90 = vunpack.c.l.b16 %v63
    %v91 = vunpack.c.l.b16 %v64
    %v92 = vpack.c.b16 %v91, %v90
    %v110 = vunpack.c.l.b16 %v65
    %v111 = vunpack.c.l.b16 %v66
    %v112 = vunpack.c.l.b16 %v67
    %v113 = vunpack.c.l.b16 %v68
    %v114 = vunpack.c.l.b16 %v69
    %v115 = vunpack.c.l.b16 %v70
    %v116 = vunpack.c.l.b16 %v71
    %v117 = vunpack.c.l.b16 %v72
    %v118 = vunpack.c.l.b16 %v73
    %v119 = vunpack.c.l.b16 %v74
    %v120 = vunpack.c.l.b16 %v75
    %v121 = vunpack.c.l.b16 %v76
    %v122 = vunpack.c.l.b16 %v77
    %v123 = vunpack.c.l.b16 %v78
    %v124 = vunpack.c.l.b16 %v79
    %v125 = vunpack.c.l.b16 %v80
    %v126 = vpack.c.b16 %v111, %v110
    %v127 = vpack.c.b16 %v113, %v112
    %v128 = vpack.c.b16 %v115, %v114
    %v129 = vpack.c.b16 %v117, %v116
    %v130 = vpack.c.b16 %v119, %v118
    %v131 = vpack.c.b16 %v121, %v120
    %v132 = vpack.c.b16 %v123, %v122
    %v133 = vpack.c.b16 %v125, %v124
    %142 = vmatprep.subr.bf16.mxu0 0
    %143 = vmatpush1.bf16.msra.mxu0 %v133
    %144 = vmatprep.subr.bf16.mxu0 0
    %145 = vmatpush1.bf16.msra.mxu0 %v132
    %146 = vmatprep.subr.bf16.mxu0 0
    %147 = vmatpush1.bf16.msra.mxu0 %v131
    %148 = vmatprep.subr.bf16.mxu0 0
    %149 = vmatpush1.bf16.msra.mxu0 %v130
    %150 = vmatprep.subr.bf16.mxu0 0
    %151 = vmatpush1.bf16.msra.mxu0 %v129
    %152 = vmatprep.subr.bf16.mxu0 0
    %153 = vmatpush1.bf16.msra.mxu0 %v128
    %154 = vmatprep.subr.bf16.mxu0 0
    %155 = vmatpush1.bf16.msra.mxu0 %v127
    %156 = vmatprep.subr.bf16.mxu0 0
    %157 = vmatpush1.bf16.msra.mxu0 %v126
    %158 = vmatprep.subr.bf16.mxu0 0
    %159 = vmatpush2.bf16.msra.mxu0 0
    %160 = vmatprep.subr.bf16.mxu0 0
    %161 = vmatpush2.bf16.msra.mxu0 0
    %162 = vmatprep.subr.bf16.mxu0 0
    %163 = vmatpush2.bf16.msra.mxu0 0
    %164 = vmatprep.subr.bf16.mxu0 0
    %165 = vmatpush2.bf16.msra.mxu0 0
    %166 = vmatprep.subr.bf16.mxu0 0
    %167 = vmatpush2.bf16.msra.mxu0 0
    %168 = vmatprep.subr.bf16.mxu0 0
    %169 = vmatpush2.bf16.msra.mxu0 0
    %170 = vmatprep.subr.bf16.mxu0 0
    %171 = vmatpush2.bf16.msra.mxu0 0
    %172 = vmatprep.subr.bf16.mxu0 0
    %173 = vmatpush2.bf16.msra.mxu0 0
    %174 = vmatprep.mubr.bf16.mxu0 0
    %175 = vmatmul.mubr.bf16.gmra.mxu0 %v92
    %v176 = vpop.f32.mrf.mxu0
    %v177 = vadd.f32 %v86, %v176
    %v178 = vpop.f32.mrf.mxu0
    %v179 = vpop.f32.mrf.mxu0
    %v180 = vadd.f32 %v86, %v179
    %v181 = vpop.f32.mrf.mxu0
    %182 = vdwg.mxu0
    %v183 = vld [vmem:[#allocation7] sm:$0xf]
    %v184 = vld [vmem:[#allocation7 + $0x4] sm:$0xf]
    %v185 = vld [vmem:[#allocation7 + $0x8] sm:$0xf]
    %v186 = vld [vmem:[#allocation7 + $0xc] sm:$0xf]
    %v187 = vld [vmem:[#allocation7 + $0x10] sm:$0xf]
    %v188 = vld [vmem:[#allocation7 + $0x14] sm:$0xf]
    %v189 = vld [vmem:[#allocation7 + $0x18] sm:$0xf]
    %v190 = vld [vmem:[#allocation7 + $0x1c] sm:$0xf]
    %v191 = vld [vmem:[#allocation7 + $0x20] sm:$0xf]
    %v192 = vld [vmem:[#allocation7 + $0x24] sm:$0xf]
    %v193 = vld [vmem:[#allocation7 + $0x28] sm:$0xf]
    %v194 = vld [vmem:[#allocation7 + $0x2c] sm:$0xf]
    %v195 = vld [vmem:[#allocation7 + $0x30] sm:$0xf]
    %v196 = vld [vmem:[#allocation7 + $0x34] sm:$0xf]
    %v197 = vld [vmem:[#allocation7 + $0x38] sm:$0xf]
    %v198 = vld [vmem:[#allocation7 + $0x3c] sm:$0xf]
    %v199 = vld [vmem:[%s4] sm:$0x1]
    %v201 = vlaneseq
    %v202 = vshrl.u32 %v201, 7
    %v203 = vsub.s32 0, %v202
    %v204 = vrot.slane %v199, %v203
    %v222 = vunpack.c.l.b16 %v183
    %v223 = vunpack.c.l.b16 %v184
    %v224 = vunpack.c.l.b16 %v185
    %v225 = vunpack.c.l.b16 %v186
    %v226 = vunpack.c.l.b16 %v187
    %v227 = vunpack.c.l.b16 %v188
    %v228 = vunpack.c.l.b16 %v189
    %v229 = vunpack.c.l.b16 %v190
    %v230 = vunpack.c.l.b16 %v191
    %v231 = vunpack.c.l.b16 %v192
    %v232 = vunpack.c.l.b16 %v193
    %v233 = vunpack.c.l.b16 %v194
    %v234 = vunpack.c.l.b16 %v195
    %v235 = vunpack.c.l.b16 %v196
    %v236 = vunpack.c.l.b16 %v197
    %v237 = vunpack.c.l.b16 %v198
    %v238 = vpack.c.b16 %v223, %v222
    %v239 = vpack.c.b16 %v225, %v224
    %v240 = vpack.c.b16 %v227, %v226
    %v241 = vpack.c.b16 %v229, %v228
    %v242 = vpack.c.b16 %v231, %v230
    %v243 = vpack.c.b16 %v233, %v232
    %v244 = vpack.c.b16 %v235, %v234
    %v245 = vpack.c.b16 %v237, %v236
    %254 = vmatprep.subr.bf16.mxu0 0
    %255 = vmatpush1.bf16.msra.mxu0 %v245
    %256 = vmatprep.subr.bf16.mxu0 0
    %257 = vmatpush1.bf16.msra.mxu0 %v244
    %258 = vmatprep.subr.bf16.mxu0 0
    %259 = vmatpush1.bf16.msra.mxu0 %v243
    %260 = vmatprep.subr.bf16.mxu0 0
    %261 = vmatpush1.bf16.msra.mxu0 %v242
    %262 = vmatprep.subr.bf16.mxu0 0
    %263 = vmatpush1.bf16.msra.mxu0 %v241
    %264 = vmatprep.subr.bf16.mxu0 0
    %265 = vmatpush1.bf16.msra.mxu0 %v240
    %266 = vmatprep.subr.bf16.mxu0 0
    %267 = vmatpush1.bf16.msra.mxu0 %v239
    %268 = vmatprep.subr.bf16.mxu0 0
    %269 = vmatpush1.bf16.msra.mxu0 %v238
    %270 = vmatprep.subr.bf16.mxu0 0
    %271 = vmatpush2.bf16.msra.mxu0 0
    %272 = vmatprep.subr.bf16.mxu0 0
    %273 = vmatpush2.bf16.msra.mxu0 0
    %274 = vmatprep.subr.bf16.mxu0 0
    %275 = vmatpush2.bf16.msra.mxu0 0
    %276 = vmatprep.subr.bf16.mxu0 0
    %277 = vmatpush2.bf16.msra.mxu0 0
    %278 = vmatprep.subr.bf16.mxu0 0
    %279 = vmatpush2.bf16.msra.mxu0 0
    %280 = vmatprep.subr.bf16.mxu0 0
    %281 = vmatpush2.bf16.msra.mxu0 0
    %282 = vmatprep.subr.bf16.mxu0 0
    %283 = vmatpush2.bf16.msra.mxu0 0
    %284 = vmatprep.subr.bf16.mxu0 0
    %285 = vmatpush2.bf16.msra.mxu0 0
    %286 = vmatprep.mubr.bf16.mxu0 0
    %287 = vmatmul.mubr.bf16.gmra.mxu0 %v92
    %v288 = vpop.f32.mrf.mxu0
    %v289 = vadd.f32 %v204, %v288
    %v290 = vpop.f32.mrf.mxu0
    %v291 = vpop.f32.mrf.mxu0
    %v292 = vadd.f32 %v204, %v291
    %v293 = vpop.f32.mrf.mxu0
    %294 = vdwg.mxu0
    %v295 = vmul.f32 %v289, 0.5
    %v296 = vmul.f32 %v292, 0.5
    %v297 = vmul.f32 %v289, 0.70710677
    %v298 = vmul.f32 %v292, 0.70710677
    %v299 = verf.f32.pop %v297
    %v300 = verf.f32.pop %v298
    %v301 = vadd.f32 %v299, 1.0
    %v302 = vadd.f32 %v300, 1.0
    %v303 = vmul.f32 %v295, %v301
    %v304 = vmul.f32 %v296, %v302
    %v305 = vmul.f32 %v177, %v303
    %v306 = vmul.f32 %v180, %v304
    %307 = vst [vmem:[#allocation8] sm:$0xff] %v305
    %308 = vst [vmem:[#allocation8 + $0x8] sm:$0xff] %v306
    // Predicated region
    $region34: #{tpu_custom_call.1} parent=1 // pred_check
      _
    $region35: #{tpu_custom_call.1} parent=1 // pred_check_branch
      %310 = sbr.rel (0) target = $region37
    $region36: #{tpu_custom_call.1} parent=1 // pred_region
      %s312 = ssub.s32 256, 256
      %313 = vsyncadd [#allocation4], %s312
      %s314 = sshll.u32 [#allocation8], 4
      %s315 = int_to_ptr.vmem [resolvable:$true] %s314
      %320 = dma.vmem_to_hbm [thread:$0]  %s315, 256, %s5, [#allocation4], 128, 128, 8
    $region37: #{tpu_custom_call.1} parent=1 // pred_fallthru
      _
    // Predicated region
    $region38: #{tpu_custom_call.1} parent=1 // pred_check
      _
    $region39: #{tpu_custom_call.1} parent=1 // pred_check_branch
      %322 = sbr.rel (0) target = $region41
    $region40: #{tpu_custom_call.1} parent=1 // pred_region
      %323 = dma.done [#allocation4], 256
    $region41: #{tpu_custom_call.1} parent=1 // pred_fallthru
      _
    %324 = vsyncpa [#allocation3], 1
    %325 = vsyncpa [#allocation6], 1
    %326 = vsyncpa [#allocation4], 1

</llo_original>
